<compile_context>
chip_gen: v7x
topology: tpu7x:2x2x1
jax: 0.10.0
libtpu: 0.0.40
codegen_flags: <defaults>
</compile_context>

<pallas_src>
import functools

import jax
import jax.numpy as jnp
from jax import lax
from jax.experimental import pallas as pl
from jax.experimental.pallas import tpu as pltpu

NUM_LEVELS = 12
WEIGHTS = (0.1, 0.1, 0.1, 0.1, 0.1, 0.15, 0.15, 0.15, 0.15, 1.0, 1.0, 1.0)

# If both stacked inputs fit in this budget, do the whole loss in ONE grid step
# (no pipelining, no per-step overhead).  Well under the v5e 16 MiB scoped-VMEM
# default (inputs are not double-buffered on the grid-less path).
_SMALL_PATH_BYTES = 4 * 1024 * 1024

# Per-input block byte target for the tiled path (default 2-deep pipelining).
_BLOCK_BYTES_TARGET = 4 * 1024 * 1024

# Padding logit for row-flattened tiles:  BCE(x=-1e4, y=0) == 0 exactly in both
# f32 and bf16 (exp underflows to 0, max(x,0)=0, x*y=0).
_PAD_LOGIT = -1.0e4


def _bce_with_logits(x, y):
    # Numerically-stable BCE with logits (same formula PyTorch uses):
    #   loss = max(x, 0) - x * y + log(1 + exp(-|x|))
    return jnp.maximum(x, 0.0) - x * y + jnp.log1p(jnp.exp(-jnp.abs(x)))


# --------------------------------------------------------------------------- #
# Kernels
# --------------------------------------------------------------------------- #
def _hiloss_single_kernel(x_ref, y_ref, per_loss_ref, *, compute_dtype):
    """Single grid step: whole (12, B, C) stack resident in VMEM.

    x_ref, y_ref:  VMEM (12, B, C) logits / labels (any float dtype)
    per_loss_ref:  SMEM (12,) mean BCE-with-logits per head
    """
    inv_n = 1.0 / float(x_ref.shape[1] * x_ref.shape[2])

    def body(i, carry):
        x = x_ref[i].astype(compute_dtype)  # (B, C)
        y = y_ref[i].astype(compute_dtype)  # (B, C)
        loss = _bce_with_logits(x, y)
        per_loss_ref[i] = jnp.sum(loss.astype(jnp.float32)) * inv_n
        return carry

    # fori_loop (not static unroll) keeps only one head's tiles live at a time.
    lax.fori_loop(0, NUM_LEVELS, body, 0)


def _hiloss_tiled_kernel(x_ref, y_ref, out_ref, *, compute_dtype):
    """Row-flattened tiled path: one (TR, 128) tile of one head per grid step.

    Every grid step is fully independent and writes its own (1, 1) SMEM output
    block -> safe under megacore ('parallel' head axis) and bounded SMEM use.

    x_ref, y_ref: VMEM (TR, 128) tiles (head dim squeezed via block_shape None)
    out_ref:      SMEM (1, 1) partial sum for this (head, tile)
    """
    x = x_ref[...].astype(compute_dtype)
    y = y_ref[...].astype(compute_dtype)
    loss = _bce_with_logits(x, y)
    out_ref[0, 0] = jnp.sum(loss.astype(jnp.float32))


# --------------------------------------------------------------------------- #
# Host-side helpers
# --------------------------------------------------------------------------- #
def _round_up(x, m):
    return ((x + m - 1) // m) * m


def _vmem_capacity_bytes():
    try:
        return int(pltpu.get_tpu_info().vmem_capacity_bytes)
    except Exception:
        return 64 << 20  # conservative: v7x physical VMEM per TensorCore


def _default_compute_dtype(input_dtype):
    """bf16 in-kernel math only for bf16 inputs on chips with bf16 VPU/EUP."""
    if jnp.dtype(input_dtype) != jnp.dtype(jnp.bfloat16):
        return jnp.float32
    try:
        kind = jax.devices()[0].device_kind.lower()
    except Exception:
        return jnp.float32
    if any(v in kind for v in ("v2", "v3", "v4", "v5")):
        return jnp.float32  # no bf16 VPU/EUP before v6e
    return jnp.bfloat16


# --------------------------------------------------------------------------- #
# Forward
# --------------------------------------------------------------------------- #
def hiloss_forward(logits_stacked, labels_stacked, *, tile_rows=None,
                   compute_dtype=None):
    """logits_stacked, labels_stacked: (12, B, C) float (f32 or bf16).

    Returns (loss, sig_loss_0, ..., sig_loss_10, base_loss_final) — 13 scalars,
    matching the PyTorch HiLoss.forward return tuple.

    For v5e (strictly HBM-bound), feed the inputs as bf16 to halve HBM traffic;
    the in-kernel math stays f32 there.  On v6e/v7x with bf16 inputs the
    elementwise math also runs in bf16 (auto-selected), final sums stay f32.
    """
    if compute_dtype is None:
        compute_dtype = _default_compute_dtype(logits_stacked.dtype)
    return _hiloss_forward_jit(
        logits_stacked, labels_stacked,
        tile_rows=None if tile_rows is None else int(tile_rows),
        compute_dtype=jnp.dtype(compute_dtype).name)


@functools.partial(jax.jit, static_argnames=("tile_rows", "compute_dtype"))
def _hiloss_forward_jit(logits_stacked, labels_stacked, *, tile_rows,
                        compute_dtype):
    compute_dtype = jnp.dtype(compute_dtype)
    L, B, C = logits_stacked.shape
    assert L == NUM_LEVELS
    assert labels_stacked.shape == logits_stacked.shape

    itemsize = jnp.dtype(logits_stacked.dtype).itemsize
    total_in_bytes = 2 * L * B * C * itemsize

    if tile_rows is None and total_in_bytes <= _SMALL_PATH_BYTES:
        # ---- single-step path: whole stack in VMEM, zero per-step overhead ----
        per_loss = pl.pallas_call(
            functools.partial(_hiloss_single_kernel, compute_dtype=compute_dtype),
            out_shape=jax.ShapeDtypeStruct((NUM_LEVELS,), jnp.float32),
            in_specs=[
                pl.BlockSpec(memory_space=pltpu.VMEM),
                pl.BlockSpec(memory_space=pltpu.VMEM),
            ],
            out_specs=pl.BlockSpec(memory_space=pltpu.SMEM),
        )(logits_stacked, labels_stacked)
    else:
        # ---- row-flattened tiled path (HBM-bandwidth bound) ------------------
        row_align = 8 if itemsize >= 4 else 16    # (8,128) rule; 16 for packed bf16
        n_elem = B * C
        rows = -(-n_elem // 128)                  # ceil(B*C / 128)

        cap = _vmem_capacity_bytes()
        ceiling = max(min(48 << 20, cap - (16 << 20)), 8 << 20)
        max_block_bytes = max((ceiling - (4 << 20)) // 4, 1 << 20)

        if tile_rows is not None:
            tr = _round_up(tile_rows, row_align)
        else:
            target_block = min(_BLOCK_BYTES_TARGET, max_block_bytes)
            target_rows = max(row_align,
                              (target_block // (128 * itemsize)) // row_align * row_align)
            tr = min(target_rows, _round_up(rows, row_align))
        rows_pad = _round_up(rows, tr)
        nbt = rows_pad // tr
        pad_elems = rows_pad * 128 - n_elem

        x2 = logits_stacked.reshape(L, n_elem)
        y2 = labels_stacked.reshape(L, n_elem)
        if pad_elems > 0:
            # Padding contributes exactly zero loss (see _PAD_LOGIT).
            x2 = jnp.pad(x2, ((0, 0), (0, pad_elems)), constant_values=_PAD_LOGIT)
            y2 = jnp.pad(y2, ((0, 0), (0, pad_elems)), constant_values=0.0)
        x3 = x2.reshape(L, rows_pad, 128)
        y3 = y2.reshape(L, rows_pad, 128)

        # 2 inputs x 2 buffers (default pipelining) + headroom, generation-capped.
        block_bytes = tr * 128 * itemsize
        vmem_limit = int(min(2 * 2 * block_bytes + (4 << 20), ceiling))

        partial = pl.pallas_call(
            functools.partial(_hiloss_tiled_kernel, compute_dtype=compute_dtype),
            out_shape=jax.ShapeDtypeStruct((NUM_LEVELS, nbt), jnp.float32),
            grid=(NUM_LEVELS, nbt),
            in_specs=[
                pl.BlockSpec((None, tr, 128), lambda h, kb: (h, kb, 0)),
                pl.BlockSpec((None, tr, 128), lambda h, kb: (h, kb, 0)),
            ],
            # Per-step (1,1) SMEM output block: no cross-step sharing, so the
            # head axis can be 'parallel' (2 TCs on v7x) without races, and
            # SMEM use is one scalar per step regardless of nbt.
            out_specs=pl.BlockSpec((1, 1), lambda h, kb: (h, kb),
                                   memory_space=pltpu.SMEM),
            compiler_params=pltpu.CompilerParams(
                dimension_semantics=("parallel", "arbitrary"),
                vmem_limit_bytes=vmem_limit,
            ),
        )(x3, y3)
        per_loss = jnp.sum(partial, axis=1) * (1.0 / float(n_elem))

    weights = jnp.asarray(WEIGHTS, dtype=jnp.float32)
    loss = jnp.dot(per_loss, weights)  # weighted total: free in XLA
    return (loss,) + tuple(per_loss[i] for i in range(NUM_LEVELS))


def _reference_forward(logits_stacked, labels_stacked, compute_dtype=jnp.float32):
    """Pure-JAX reference (mirrors PyTorch BCEWithLogitsLoss + weighted sum)."""
    x = logits_stacked.astype(compute_dtype)
    y = labels_stacked.astype(compute_dtype)
    per_loss = jnp.mean(_bce_with_logits(x, y).astype(jnp.float32), axis=(1, 2))
    weights = jnp.asarray(WEIGHTS, dtype=jnp.float32)
    loss = jnp.sum(per_loss * weights)
    return (loss,) + tuple(per_loss[i] for i in range(NUM_LEVELS))


if __name__ == "__main__":
    key = jax.random.PRNGKey(0)
    k1, k2, k3, k4, k5, k6 = jax.random.split(key, 6)

    # ---- shipped small shape: 12 heads, batch=8, 128 classes (single-step path) ----
    B, C = 8, 128
    logits = jax.random.normal(k1, (NUM_LEVELS, B, C), jnp.float32)
    labels = jax.random.uniform(k2, (NUM_LEVELS, B, C), jnp.float32)

    out = jax.block_until_ready(hiloss_forward(logits, labels))
    ref = _reference_forward(logits, labels)
    for a, b in zip(out, ref):
        assert jnp.allclose(a, b, rtol=1e-5, atol=1e-5), (a, b)

    # ---- bf16 inputs, forced f32 in-kernel math (matches f32 reference closely) ----
    lb, yb = logits.astype(jnp.bfloat16), labels.astype(jnp.bfloat16)
    out_bf = jax.block_until_ready(
        hiloss_forward(lb, yb, compute_dtype=jnp.float32))
    ref_bf = _reference_forward(lb, yb)
    for a, b in zip(out_bf, ref_bf):
        assert jnp.allclose(a, b, rtol=1e-4, atol=1e-4), (a, b)

    # ---- bf16 inputs, auto compute dtype (bf16 math on v6e/v7x, f32 on v5e) ----
    out_auto = jax.block_until_ready(hiloss_forward(lb, yb))
    for a, b in zip(out_auto, ref_bf):
        assert jnp.allclose(a, b, rtol=2e-2, atol=2e-2), (a, b)

    # ---- tiled path, explicit tile size, no padding (B*C = 8192 -> 64 rows) ----
    B2, C2 = 32, 256
    logits2 = jax.random.normal(k3, (NUM_LEVELS, B2, C2), jnp.float32)
    labels2 = jax.random.uniform(k4, (NUM_LEVELS, B2, C2), jnp.float32)
    out2 = jax.block_until_ready(hiloss_forward(logits2, labels2, tile_rows=16))
    ref2 = _reference_forward(logits2, labels2)
    for a, b in zip(out2, ref2):
        assert jnp.allclose(a, b, rtol=1e-5, atol=1e-5), (a, b)

    # ---- tiled path with lane padding (B*C = 800, not a multiple of 128) ----
    B3, C3 = 8, 100
    logits3 = jax.random.normal(k5, (NUM_LEVELS, B3, C3), jnp.float32)
    labels3 = jax.random.uniform(k6, (NUM_LEVELS, B3, C3), jnp.float32)
    out3 = jax.block_until_ready(hiloss_forward(logits3, labels3, tile_rows=8))
    ref3 = _reference_forward(logits3, labels3)
    for a, b in zip(out3, ref3):
        assert jnp.allclose(a, b, rtol=1e-5, atol=1e-5), (a, b)

    # TODO(synk): select_background() uses host-side Python `random.sample`
    # (data-dependent subsampling) and is not called in forward(); left unported.
    print("KERNEL_OK")
</pallas_src>

<mosaic_0001>
module attributes {stable_mosaic.version = 11 : i64} {
  func.func @_hiloss_single_kernel(%arg0: memref<12x8x128xf32, #tpu.memory_space<vmem>>, %arg1: memref<12x8x128xf32, #tpu.memory_space<vmem>>, %arg2: memref<12xf32, #tpu.memory_space<smem>>) attributes {dimension_semantics = [], scalar_prefetch = 0 : i64, scratch_operands = 0 : i64, tpu.core_type = #tpu.core_type<tc>} {
    %c0_i32 = arith.constant 0 : i32
    %c12_i32 = arith.constant 12 : i32
    %0 = arith.addi %c0_i32, %c12_i32 : i32
    %c1_i32 = arith.constant 1 : i32
    scf.for %arg3 = %c0_i32 to %0 step %c1_i32  : i32 {
      %1 = arith.index_cast %arg3 : i32 to index
      %c0 = arith.constant 0 : index
      %c0_1 = arith.constant 0 : index
      %2 = vector.load %arg0[%1, %c0, %c0_1] : memref<12x8x128xf32, #tpu.memory_space<vmem>>, vector<1x8x128xf32>
      %3 = vector.shape_cast %2 : vector<1x8x128xf32> to vector<8x128xf32>
      %4 = arith.index_cast %arg3 : i32 to index
      %c0_2 = arith.constant 0 : index
      %c0_3 = arith.constant 0 : index
      %5 = vector.load %arg1[%4, %c0_2, %c0_3] : memref<12x8x128xf32, #tpu.memory_space<vmem>>, vector<1x8x128xf32>
      %6 = vector.shape_cast %5 : vector<1x8x128xf32> to vector<8x128xf32>
      %cst = arith.constant 0.000000e+00 : f32
      %7 = vector.broadcast %cst : f32 to vector<8x128xf32>
      %8 = arith.maximumf %3, %7 : vector<8x128xf32>
      %9 = arith.mulf %3, %6 : vector<8x128xf32>
      %10 = arith.subf %8, %9 : vector<8x128xf32>
      %11 = math.absf %3 : vector<8x128xf32>
      %cst_4 = arith.constant 0.000000e+00 : f32
      %12 = vector.broadcast %cst_4 : f32 to vector<8x128xf32>
      %13 = arith.subf %12, %11 : vector<8x128xf32>
      %14 = math.exp %13 : vector<8x128xf32>
      %15 = math.log1p %14 : vector<8x128xf32>
      %16 = arith.addf %10, %15 : vector<8x128xf32>
      %17 = vector.shape_cast %16 : vector<8x128xf32> to vector<1x8x128xf32>
      %cst_5 = arith.constant dense<0.000000e+00> : vector<1xf32>
      %18 = vector.multi_reduction <add>, %17, %cst_5 [1, 2] : vector<1x8x128xf32> to vector<1xf32>
      %19 = vector.shape_cast %18 : vector<1xf32> to vector<1x1x1xf32>
      %20 = vector.extract %19[0, 0, 0] : f32 from vector<1x1x1xf32>
      %cst_6 = arith.constant 9.765625E-4 : f32
      %21 = arith.mulf %20, %cst_6 : f32
      %22 = arith.index_cast %arg3 : i32 to index
      %23 = memref.load %arg2[%22] : memref<12xf32, #tpu.memory_space<smem>>
      memref.store %21, %arg2[%22] : memref<12xf32, #tpu.memory_space<smem>>
    }
    %c12_i32_0 = arith.constant 12 : i32
    return
  }
}

</mosaic_0001>

<llo_original>
// kernel: _hiloss_forward_jit.1
$region0: #{_hiloss_forward_jit.1}
  #allocation0 [shape = 'u32[]', space=smem, size = 0x4, offset = 0x4, fixed_abs, tag = 'smem constant byte address 0x4 - core index']
  #allocation1 [shape = 'u32[144,128]{1,0:T(1,128)}', space=vmem, size = 0x12000, scoped, tag = 'internal scratch']
  %s0 = inlined_call_operand.hbm [shape: f32[12,8,128], index: 0, kind: input, shape index: {}]
  %s1 = inlined_call_operand.hbm [shape: f32[12,8,128], index: 1, kind: input, shape index: {}]
  %s2 = inlined_call_operand.vmem [shape: f32[12], index: 2, kind: output, shape index: {}]
  %s3 = sld [smem:[#allocation0]]
  $region33: #{_hiloss_forward_jit.1} parent=0
    _
  %s5 = ssub.s32 1, %s3
  %s6 = scalar_select 0, %s5, %s3
  $region1: #{_hiloss_forward_jit.1} parent=0
    #allocation2 [shape = 'u8[49152]{0}', space=vmem, size = 0xc000, scoped, tag = 'input window, operand 0, single buffered']
    #allocation3 [shape = 's32[1]{0}', space=sflag, size = 0x4, scoped, tag = 'scoped memory for _hiloss_forward_jit.1']
    #allocation4 [shape = 's32[1]{0}', space=sflag, size = 0x4, scoped, tag = 'scoped memory for _hiloss_forward_jit.1']
    #allocation5 [shape = 'u8[49152]{0}', space=vmem, size = 0xc000, scoped, tag = 'input window, operand 1, single buffered']
    #allocation6 [shape = 's32[1]{0}', space=sflag, size = 0x4, scoped, tag = 'scoped memory for _hiloss_forward_jit.1']
    #allocation7 [shape = 'u8[512]{0}', space=smem, size = 0x200, scoped, tag = 'output window, operand 0, single buffered']
    %7 = vsyncpa [#allocation3], 0
    %8 = vsyncpa [#allocation6], 0
    %9 = vsyncpa [#allocation4], 0
    // Predicated region
    $region2: #{_hiloss_forward_jit.1} parent=1 // pred_check
      _
    $region3: #{_hiloss_forward_jit.1} parent=1 // pred_check_branch
      %11 = sbr.rel (0) target = $region5
    $region4: #{_hiloss_forward_jit.1} parent=1 // pred_region
      %s13 = ssub.s32 1536, 1536
      %14 = vsyncadd [#allocation3], %s13
      %s15 = sshll.u32 [#allocation2], 4
      %s16 = int_to_ptr.vmem [resolvable:$true] %s15
      %21 = dma.hbm_to_vmem [thread:$0]  %s0, 1536, %s16, [#allocation3], 128, 128, 8
    $region5: #{_hiloss_forward_jit.1} parent=1 // pred_fallthru
      _
    // Predicated region
    $region6: #{_hiloss_forward_jit.1} parent=1 // pred_check
      _
    $region7: #{_hiloss_forward_jit.1} parent=1 // pred_check_branch
      %23 = sbr.rel (0) target = $region9
    $region8: #{_hiloss_forward_jit.1} parent=1 // pred_region
      %s25 = ssub.s32 1536, 1536
      %26 = vsyncadd [#allocation6], %s25
      %s27 = sshll.u32 [#allocation5], 4
      %s28 = int_to_ptr.vmem [resolvable:$true] %s27
      %33 = dma.hbm_to_vmem [thread:$0]  %s1, 1536, %s28, [#allocation6], 128, 128, 8
    $region9: #{_hiloss_forward_jit.1} parent=1 // pred_fallthru
      _
    // Predicated region
    $region10: #{_hiloss_forward_jit.1} parent=1 // pred_check
      _
    $region11: #{_hiloss_forward_jit.1} parent=1 // pred_check_branch
      %35 = sbr.rel (0) target = $region13
    $region12: #{_hiloss_forward_jit.1} parent=1 // pred_region
      %36 = dma.done [#allocation3], 1536
    $region13: #{_hiloss_forward_jit.1} parent=1 // pred_fallthru
      _
    // Predicated region
    $region14: #{_hiloss_forward_jit.1} parent=1 // pred_check
      _
    $region15: #{_hiloss_forward_jit.1} parent=1 // pred_check_branch
      %38 = sbr.rel (0) target = $region17
    $region16: #{_hiloss_forward_jit.1} parent=1 // pred_region
      %39 = dma.done [#allocation6], 1536
    $region17: #{_hiloss_forward_jit.1} parent=1 // pred_fallthru
      _
    loop: start=0, step=1, limit=12
    $region18: #{_hiloss_forward_jit.1} parent=1 // loop_pre_header
      _
    $region19: #{_hiloss_forward_jit.1} parent=1 // loop_header
      %s41 = sphi 0, %s45
      %p42 = scmp.ge.s32.totalorder %s41, 12
    $region20: #{_hiloss_forward_jit.1} parent=1 // loop_header_branch
      %44 = sbr.rel (%p42) target = $region24
    $region21: #{_hiloss_forward_jit.1} parent=1 // loop_body
      %s46 = smul.u32 %s41, 8
      %s47 = scalar_lea.vmem [#allocation2], %s46
      %v48 = vld [vmem:[%s47] sm:$0xff]
      %s49 = scalar_lea.vmem [#allocation5], %s46
      %v50 = vld [vmem:[%s49] sm:$0xff]
      %v51 = vmax.f32 %v48, 0.0
      %v52 = vmul.f32 %v48, %v50
      %v53 = vsub.f32 %v51, %v52
      %v54 = vand.u32 2147483647, %v48
      %v55 = vsub.f32 0.0, %v54
      %v56 = vmul.f32 %v55, 1.442695
      %v57 = vpow.pop %v56
      %v58 = vadd.f32 %v57, 1.0
      %v59 = vlog2.pop %v58
      %v60 = vmul.f32 %v59, 0.6931472
      %v61 = vmul.f32 -0.5, %v57
      %v62 = vadd.f32 %v61, 1.0
      %v63 = vmul.f32 %v62, %v57
      %v64 = vand.u32 2147483647, %v57
      %vm65 = vcmp.lt.f32.partialorder %v64, 0.0004427343
      %v66 = vsel %vm65, %v63, %v60
      %v67 = vadd.f32 %v53, %v66
      %68 = vadd.xlane.f32.xlu0 %v67
      %v69 = vpop.xlane.xlu0 %68
      %v70 = vrot.slane %v69, 4
      %v71 = vadd.f32 %v69, %v70
      %v72 = vrot.slane %v71, 2
      %v73 = vadd.f32 %v71, %v72
      %v74 = vrot.slane %v73, 1
      %v75 = vadd.f32 %v73, %v74
      %s76 = vtos %v75
      %s77 = smul.f32 %s76, 0.0009765625
      %s78 = scalar_lea.smem [#allocation7], %s41
      %79 = sst [smem:[%s78]] %s77
    $region22: #{_hiloss_forward_jit.1} parent=1 // loop_footer
      %s45 = sadd.s32 1, %s41
    $region23: #{_hiloss_forward_jit.1} parent=1 // loop_footer_branch
      %40 = sbr.rel target = $region19
    $region24: #{_hiloss_forward_jit.1} parent=1 // loop_exit
      _
    // Predicated region
    $region25: #{_hiloss_forward_jit.1} parent=1 // pred_check
      _
    $region26: #{_hiloss_forward_jit.1} parent=1 // pred_check_branch
      %81 = sbr.rel (0) target = $region28
    $region27: #{_hiloss_forward_jit.1} parent=1 // pred_region
      %s83 = ssub.s32 16, 16
      %84 = vsyncadd [#allocation4], %s83
      %s86 = sshll.u32 %s2, 4
      %s87 = int_to_ptr.vmem [resolvable:$true] %s86
      %89 = dma.smem_to_vmem [#allocation7], 16, %s87, [#allocation4]
    $region28: #{_hiloss_forward_jit.1} parent=1 // pred_fallthru
      _
    // Predicated region
    $region29: #{_hiloss_forward_jit.1} parent=1 // pred_check
      _
    $region30: #{_hiloss_forward_jit.1} parent=1 // pred_check_branch
      %91 = sbr.rel (0) target = $region32
    $region31: #{_hiloss_forward_jit.1} parent=1 // pred_region
      %92 = dma.done [#allocation4], 16
    $region32: #{_hiloss_forward_jit.1} parent=1 // pred_fallthru
      _
    %93 = sfence
    %94 = vsyncpa [#allocation3], 1
    %95 = vsyncpa [#allocation6], 1
    %96 = vsyncpa [#allocation4], 1

</llo_original>
